<compile_context>
chip_gen: v5e
topology: v5e:2x2
jax: 0.10.0
libtpu: 0.0.40
codegen_flags: <defaults>
</compile_context>

<pallas_src>
import functools
import math

import jax
import jax.numpy as jnp
from jax import lax
from jax.experimental import pallas as pl
from jax.experimental.pallas import tpu as pltpu


def _round_up(x, m):
    return (x + m - 1) // m * m


# ---------------------------------------------------------------------------
# Kernel 1: fused wide matmul   [support | selfbias] = x @ [W | W_self] (+bias)
# Grid: (row tiles,).  Weights stay fully resident (small F_in x 2*F_out_pad).
# Padded rows (>= n_true) are masked to zero so BN stats later are exact.
# ---------------------------------------------------------------------------
def xw_kernel(x_ref, wcat_ref, bias_ref, sup_ref, sb_ref, *,
              f_out_p, tm, n_true, n_pad):
    acc = jnp.dot(x_ref[...], wcat_ref[...], preferred_element_type=jnp.float32)
    sup_ref[...] = acc[:, :f_out_p]

    sb = acc[:, f_out_p:] + bias_ref[...]
    if n_pad != n_true:  # static: only emit the mask when padding exists
        i = pl.program_id(0)
        row = i * tm + lax.broadcasted_iota(jnp.int32, (tm, 1), 0)
        sb = jnp.where(row < n_true, sb, 0.0)
    sb_ref[...] = sb


# ---------------------------------------------------------------------------
# Kernel 2: out = adj @ support + selfbias, tiled (tm x tk) with k-reduction.
# Accumulates directly into the resident f32 output block.  At the last k step
# it emits per-row-tile partial column sums / sums-of-squares for BatchNorm
# (stored as an 8-row slab per tile to keep block shapes (8,128)-friendly).
# ---------------------------------------------------------------------------
def adj_matmul_kernel(adj_ref, sup_ref, sb_ref, out_ref, psum_ref, psumsq_ref):
    k = pl.program_id(1)

    @pl.when(k == 0)
    def _init():
        out_ref[...] = sb_ref[...]

    out_ref[...] += jnp.dot(adj_ref[...], sup_ref[...],
                            preferred_element_type=jnp.float32)

    @pl.when(k == pl.num_programs(1) - 1)
    def _stats():
        y = out_ref[...]
        s = jnp.sum(y, axis=0, keepdims=True)
        sq = jnp.sum(y * y, axis=0, keepdims=True)
        psum_ref[...] = jnp.broadcast_to(s, psum_ref.shape)
        psumsq_ref[...] = jnp.broadcast_to(sq, psumsq_ref.shape)


# ---------------------------------------------------------------------------
# Kernel 3: row-tiled BatchNorm1d normalize pass (gamma=1, beta=0, eps=1e-5).
# Each 8-row slab of psum/psumsq carries 8 identical copies of its tile's
# column sum, hence the 1/(8*N) factor.
# ---------------------------------------------------------------------------
def bn_kernel(y_ref, psum_ref, psumsq_ref, o_ref, *, n_true, eps):
    denom = 1.0 / (8.0 * n_true)
    mean = jnp.sum(psum_ref[...], axis=0, keepdims=True) * denom
    meansq = jnp.sum(psumsq_ref[...], axis=0, keepdims=True) * denom
    var = meansq - mean * mean                      # biased variance (BN training)
    inv = lax.rsqrt(var + eps)
    o_ref[...] = (y_ref[...] - mean) * inv


# ---------------------------------------------------------------------------
# Wrapper
# ---------------------------------------------------------------------------
def graph_convolution_bs(x, adj, w, w_self, bias, *, tm=128, tk=256, eps=1e-5):
    n, f_in = x.shape
    f_out = w.shape[1]

    f_out_p = _round_up(f_out, 128)               # lane-dense output columns
    n_pad = _round_up(n, math.lcm(tm, tk))        # exact grids, no dropped rows
    n_i = n_pad // tm
    n_k = n_pad // tk

    # zero-pad inputs / parameters (wrapper-level glue)
    x_p = jnp.zeros((n_pad, f_in), jnp.float32).at[:n, :].set(x.astype(jnp.float32))
    adj_p = jnp.zeros((n_pad, n_pad), jnp.float32).at[:n, :n].set(adj.astype(jnp.float32))
    w_p = jnp.zeros((f_in, f_out_p), jnp.float32).at[:, :f_out].set(w)
    ws_p = jnp.zeros((f_in, f_out_p), jnp.float32).at[:, :f_out].set(w_self)
    wcat = jnp.concatenate([w_p, ws_p], axis=1)   # [F_in, 2*F_out_pad]
    b_p = jnp.zeros((1, f_out_p), jnp.float32).at[0, :f_out].set(bias)

    vmem_cap = 64 * 1024 * 1024  # explicit scoped-VMEM budget (fits v5e/v6e/v7x)

    # ---- Kernel 1: support / selfbias precompute -------------------------
    support, selfbias = pl.pallas_call(
        functools.partial(xw_kernel, f_out_p=f_out_p, tm=tm, n_true=n, n_pad=n_pad),
        out_shape=(jax.ShapeDtypeStruct((n_pad, f_out_p), jnp.float32),
                   jax.ShapeDtypeStruct((n_pad, f_out_p), jnp.float32)),
        grid_spec=pltpu.PrefetchScalarGridSpec(
            num_scalar_prefetch=0,
            grid=(n_i,),
            in_specs=[
                pl.BlockSpec((tm, f_in), lambda i: (i, 0)),          # x row tile
                pl.BlockSpec((f_in, 2 * f_out_p), lambda i: (0, 0)),  # [W | W_self]
                pl.BlockSpec((1, f_out_p), lambda i: (0, 0)),         # bias
            ],
            out_specs=[
                pl.BlockSpec((tm, f_out_p), lambda i: (i, 0)),        # support
                pl.BlockSpec((tm, f_out_p), lambda i: (i, 0)),        # selfbias
            ],
        ),
        compiler_params=pltpu.CompilerParams(
            dimension_semantics=("parallel",),
            vmem_limit_bytes=vmem_cap),
    )(x_p, wcat, b_p)

    # ---- Kernel 2: adj @ support + selfbias, with fused BN partial stats --
    out_pre, psum, psumsq = pl.pallas_call(
        adj_matmul_kernel,
        out_shape=(jax.ShapeDtypeStruct((n_pad, f_out_p), jnp.float32),
                   jax.ShapeDtypeStruct((n_i * 8, f_out_p), jnp.float32),
                   jax.ShapeDtypeStruct((n_i * 8, f_out_p), jnp.float32)),
        grid_spec=pltpu.PrefetchScalarGridSpec(
            num_scalar_prefetch=0,
            grid=(n_i, n_k),
            in_specs=[
                pl.BlockSpec((tm, tk), lambda i, k: (i, k)),          # adj tile
                pl.BlockSpec((tk, f_out_p), lambda i, k: (k, 0)),     # support k-tile
                pl.BlockSpec((tm, f_out_p), lambda i, k: (i, 0)),     # selfbias row tile
            ],
            out_specs=[
                pl.BlockSpec((tm, f_out_p), lambda i, k: (i, 0)),     # out (resident acc)
                pl.BlockSpec((8, f_out_p), lambda i, k: (i, 0)),      # partial col sums
                pl.BlockSpec((8, f_out_p), lambda i, k: (i, 0)),      # partial col sumsq
            ],
        ),
        compiler_params=pltpu.CompilerParams(
            dimension_semantics=("parallel", "arbitrary"),
            vmem_limit_bytes=vmem_cap),
    )(adj_p, support, selfbias)

    # ---- Kernel 3: BatchNorm normalize (row-tiled) -------------------------
    out_bn = pl.pallas_call(
        functools.partial(bn_kernel, n_true=float(n), eps=eps),
        out_shape=jax.ShapeDtypeStruct((n_pad, f_out_p), jnp.float32),
        grid_spec=pltpu.PrefetchScalarGridSpec(
            num_scalar_prefetch=0,
            grid=(n_i,),
            in_specs=[
                pl.BlockSpec((tm, f_out_p), lambda i: (i, 0)),        # pre-BN rows
                pl.BlockSpec((n_i * 8, f_out_p), lambda i: (0, 0)),   # partial sums
                pl.BlockSpec((n_i * 8, f_out_p), lambda i: (0, 0)),   # partial sumsq
            ],
            out_specs=pl.BlockSpec((tm, f_out_p), lambda i: (i, 0)),
        ),
        compiler_params=pltpu.CompilerParams(
            dimension_semantics=("parallel",),
            vmem_limit_bytes=vmem_cap),
    )(out_pre, psum, psumsq)

    return out_bn[:n, :f_out]


# ---------------------------------------------------------------------------
# Deterministic parameter setup (mirrors __init__ shapes + glorot init)
# ---------------------------------------------------------------------------
def glorot_uniform(key, shape):
    stdv = math.sqrt(6.0 / (shape[-2] + shape[-1]))
    return jax.random.uniform(key, shape, jnp.float32, -stdv, stdv)


if __name__ == "__main__":
    # Small but tile-exercising shapes: N not a multiple of the tiles and
    # F_OUT not a multiple of 128 so the padding/masking paths are tested.
    N, F_IN, F_OUT = 200, 128, 96

    key = jax.random.PRNGKey(0)
    kx, ka, kw, kws, kb = jax.random.split(key, 5)

    x = jax.random.normal(kx, (N, F_IN), jnp.float32)

    # symmetric row-normalized dense adjacency with self loops
    a = (jax.random.uniform(ka, (N, N)) < 0.3).astype(jnp.float32)
    a = jnp.maximum(a, a.T) + jnp.eye(N, dtype=jnp.float32)
    adj = a / jnp.sum(a, axis=1, keepdims=True)

    w = glorot_uniform(kw, (F_IN, F_OUT))
    # NOTE: the torch reset_parameters() never glorot-inits self_weight (a bug in
    # the reference); we init it deterministically here for a well-defined kernel.
    w_self = glorot_uniform(kws, (F_IN, F_OUT))
    # module's zeros() init would make the bias path a no-op; use a small nonzero
    # bias so the bias-add + padded-row masking are actually exercised.
    bias = 0.1 * jax.random.normal(kb, (F_OUT,), jnp.float32)

    out = graph_convolution_bs(x, adj, w, w_self, bias)
    out = jax.block_until_ready(out)

    # pure-JAX reference
    ref = adj @ (x @ w) + x @ w_self + bias
    mean = ref.mean(axis=0, keepdims=True)
    var = ((ref - mean) ** 2).mean(axis=0, keepdims=True)
    ref = (ref - mean) / jnp.sqrt(var + 1e-5)

    assert out.shape == (N, F_OUT)
    err = float(jnp.max(jnp.abs(out - ref)))
    assert jnp.allclose(out, ref, atol=1e-3, rtol=1e-3), f"mismatch vs reference, max_abs_err={err}"

    print("KERNEL_OK")
</pallas_src>

<mosaic_0001>
module attributes {stable_mosaic.version = 11 : i64} {
  func.func @xw_kernel(%arg0: i32, %arg1: memref<128x128xf32, #tpu.memory_space<vmem>>, %arg2: memref<128x256xf32, #tpu.memory_space<vmem>>, %arg3: memref<1x128xf32, #tpu.memory_space<vmem>>, %arg4: memref<128x128xf32, #tpu.memory_space<vmem>>, %arg5: memref<128x128xf32, #tpu.memory_space<vmem>>) attributes {dimension_semantics = [#tpu.dimension_semantics<parallel>], iteration_bounds = array<i64: 2>, scalar_prefetch = 0 : i64, scratch_operands = 0 : i64, tpu.core_type = #tpu.core_type<tc>, window_params = [{transform_indices = @transform_0, window_bounds = array<i64: 128, 128>}, {pipeline_mode = #tpu.pipeline_mode<synchronous>, transform_indices = @transform_1, window_bounds = array<i64: 128, 256>}, {pipeline_mode = #tpu.pipeline_mode<synchronous>, transform_indices = @transform_2, window_bounds = array<i64: 1, 128>}, {transform_indices = @transform_3, window_bounds = array<i64: 128, 128>}, {transform_indices = @transform_4, window_bounds = array<i64: 128, 128>}]} {
    %c0 = arith.constant 0 : index
    %c0_0 = arith.constant 0 : index
    %0 = vector.load %arg1[%c0, %c0_0] : memref<128x128xf32, #tpu.memory_space<vmem>>, vector<128x128xf32>
    %c0_1 = arith.constant 0 : index
    %c0_2 = arith.constant 0 : index
    %1 = vector.load %arg2[%c0_1, %c0_2] : memref<128x256xf32, #tpu.memory_space<vmem>>, vector<128x256xf32>
    %cst = arith.constant dense<0.000000e+00> : vector<128x256xf32>
    %2 = tpu.matmul %0, %1, %cst {dimension_numbers = #tpu.dot_dimension_numbers<[1], [0], [0], [1], [0, 0, 1, 1], [], []>} : vector<128x128xf32>, vector<128x256xf32>, vector<128x256xf32> -> vector<128x256xf32>
    %3 = vector.extract_strided_slice %2 {offsets = [0, 0], sizes = [128, 128], strides = [1, 1]} : vector<128x256xf32> to vector<128x128xf32>
    %c0_3 = arith.constant 0 : index
    %c0_4 = arith.constant 0 : index
    %4 = vector.load %arg4[%c0_3, %c0_4] : memref<128x128xf32, #tpu.memory_space<vmem>>, vector<128x128xf32>
    tpu.vector_store %arg4[%c0_3, %c0_4], %3 {strides = array<i32>} : memref<128x128xf32, #tpu.memory_space<vmem>>, vector<128x128xf32>,
    %5 = vector.extract_strided_slice %2 {offsets = [0, 128], sizes = [128, 128], strides = [1, 1]} : vector<128x256xf32> to vector<128x128xf32>
    %c0_5 = arith.constant 0 : index
    %c0_6 = arith.constant 0 : index
    %6 = vector.load %arg3[%c0_5, %c0_6] : memref<1x128xf32, #tpu.memory_space<vmem>>, vector<1x128xf32>
    %7 = vector.broadcast %6 : vector<1x128xf32> to vector<128x128xf32>
    %8 = arith.addf %5, %7 : vector<128x128xf32>
    %c128_i32 = arith.constant 128 : i32
    %9 = arith.muli %arg0, %c128_i32 : i32
    %10 = tpu.iota {dimensions = array<i32: 0>} : vector<128x1xi32>
    %11 = vector.broadcast %9 : i32 to vector<128x1xi32>
    %12 = arith.addi %11, %10 : vector<128x1xi32>
    %c200_i32 = arith.constant 200 : i32
    %13 = vector.broadcast %c200_i32 : i32 to vector<128x1xi32>
    %14 = arith.cmpi slt, %12, %13 : vector<128x1xi32>
    %cst_7 = arith.constant 0.000000e+00 : f32
    %15 = vector.shape_cast %14 : vector<128x1xi1> to vector<128x1xi1>
    %16 = vector.broadcast %15 : vector<128x1xi1> to vector<128x128xi1>
    %17 = vector.broadcast %cst_7 : f32 to vector<128x128xf32>
    %18 = arith.select %16, %8, %17 : vector<128x128xi1>, vector<128x128xf32>
    %c0_8 = arith.constant 0 : index
    %c0_9 = arith.constant 0 : index
    %19 = vector.load %arg5[%c0_8, %c0_9] : memref<128x128xf32, #tpu.memory_space<vmem>>, vector<128x128xf32>
    tpu.vector_store %arg5[%c0_8, %c0_9], %18 {strides = array<i32>} : memref<128x128xf32, #tpu.memory_space<vmem>>, vector<128x128xf32>,
    return
  }
  func.func @transform_0(%arg0: i32) -> (i32, i32) {
    %c0_i32 = arith.constant 0 : i32
    %c0_i32_0 = arith.constant 0 : i32
    return %arg0, %c0_i32 : i32, i32
  }
  func.func @transform_1(%arg0: i32) -> (i32, i32) {
    %c0_i32 = arith.constant 0 : i32
    %c0_i32_0 = arith.constant 0 : i32
    %c0_i32_1 = arith.constant 0 : i32
    return %c0_i32, %c0_i32_0 : i32, i32
  }
  func.func @transform_2(%arg0: i32) -> (i32, i32) {
    %c0_i32 = arith.constant 0 : i32
    %c0_i32_0 = arith.constant 0 : i32
    %c0_i32_1 = arith.constant 0 : i32
    return %c0_i32, %c0_i32_0 : i32, i32
  }
  func.func @transform_3(%arg0: i32) -> (i32, i32) {
    %c0_i32 = arith.constant 0 : i32
    %c0_i32_0 = arith.constant 0 : i32
    return %arg0, %c0_i32 : i32, i32
  }
  func.func @transform_4(%arg0: i32) -> (i32, i32) {
    %c0_i32 = arith.constant 0 : i32
    %c0_i32_0 = arith.constant 0 : i32
    return %arg0, %c0_i32 : i32, i32
  }
}

</mosaic_0001>

<llo_original>
// kernel: tpu_custom_call.1
$region0: #{tpu_custom_call.1}
  #allocation0 [shape = 'u32[]', space=smem, size = 0x4, offset = 0x4, fixed_abs, tag = 'smem constant byte address 0x4 - core index']
  #allocation1 [shape = 'u32[72,128]{1,0:T(1,128)}', space=vmem, size = 0x9000, scoped, tag = 'internal scratch']
  %s0 = inlined_call_operand.hbm [shape: f32[256,128], index: 0, kind: input, shape index: {}]
  %s1 = inlined_call_operand.hbm [shape: f32[128,256], index: 1, kind: input, shape index: {}]
  %s2 = inlined_call_operand.vmem [shape: f32[1,128], index: 2, kind: input, shape index: {}]
  %s3 = inlined_call_operand.hbm [shape: f32[256,128], index: 3, kind: output, shape index: {0}]
  %s4 = inlined_call_operand.hbm [shape: f32[256,128], index: 4, kind: output, shape index: {1}]
  %5 = xla_tuple %s3, %s4
  %s6 = sld [smem:[#allocation0]]
  $region61: #{tpu_custom_call.1} parent=0
    _
  %s8 = ssub.s32 1, %s6
  %s9 = scalar_select 0, %s8, %s6
  $region1: #{tpu_custom_call.1} parent=0
    #allocation2 [shape = 'u8[131072]{0}', space=vmem, size = 0x20000, scoped, tag = 'input window, operand 0']
    #allocation3 [shape = 's32[2]{0}', space=sflag, size = 0x8, scoped, tag = 'scoped memory for tpu_custom_call.1']
    #allocation4 [shape = 's32[2]{0}', space=sflag, size = 0x8, scoped, tag = 'scoped memory for tpu_custom_call.1']
    #allocation5 [shape = 'u8[131072]{0}', space=vmem, size = 0x20000, scoped, tag = 'input window, operand 1, single buffered']
    #allocation6 [shape = 's32[1]{0}', space=sflag, size = 0x4, scoped, tag = 'scoped memory for tpu_custom_call.1']
    #allocation7 [shape = 'u8[131072]{0}', space=vmem, size = 0x20000, scoped, tag = 'output window, operand 0']
    #allocation8 [shape = 'u8[131072]{0}', space=vmem, size = 0x20000, scoped, tag = 'output window, operand 1']
    #allocation9 [shape = 's32[2]{0}', space=sflag, size = 0x8, scoped, tag = 'scoped memory for tpu_custom_call.1']
    %10 = vsyncpa [#allocation3], 0
    %s11 = scalar_lea.sflag [#allocation3], 1
    %12 = vsyncpa %s11, 0
    %13 = vsyncpa [#allocation6], 0
    %14 = vsyncpa [#allocation4], 0
    %s15 = scalar_lea.sflag [#allocation4], 1
    %16 = vsyncpa %s15, 0
    %17 = vsyncpa [#allocation9], 0
    %s18 = scalar_lea.sflag [#allocation9], 1
    %19 = vsyncpa %s18, 0
    loop: start=0, step=1, limit=4
    $region2: #{tpu_custom_call.1} parent=1 // loop_pre_header
      _
    $region3: #{tpu_custom_call.1} parent=1 // loop_header
      %s21 = sphi 0, %s25
      %p22 = scmp.ge.s32.totalorder %s21, 4
      %s31 = sphi 0, %s33
      %s34 = sphi 0, %s31
      %s35 = sphi 0, %s34
      %s51 = sphi 0, %s35
      %s55 = sphi 0, %s55
      %s57 = sphi 0, %s55
      %s58 = sphi 0, %s57
      %s72 = sphi 0, %s58
      %s76 = sphi 0, %s76
      %s78 = sphi 0, %s76
      %s79 = sphi 0, %s78
      %s93 = sphi 0, %s79
      %s99 = sphi 0, %s101
      %s102 = sphi 0, %s99
      %s103 = sphi 0, %s102
      %s119 = sphi 0, %s103
      %s125 = sphi 0, %s127
      %s128 = sphi 0, %s125
      %s129 = sphi 0, %s128
      %s145 = sphi 0, %s129
    $region4: #{tpu_custom_call.1} parent=1 // loop_header_branch
      %24 = sbr.rel (%p22) target = $region8
    $region5: #{tpu_custom_call.1} parent=1 // loop_body
      %s26 = ssub.s32 %s21, 1
      %s27 = ssub.s32 %s21, 2
      %s28 = sadd.s32 %s21, 1
      %s29 = ssub.s32 %s21, %s28
      %p30 = scmp.eq.s32.totalorder %s29, 0
      %s32 = sadd.s32 %s31, 1
      %s33 = scalar_select %p30, %s31, %s32
      %p36 = pneg %p30
      %p37 = scmp.eq.s32.totalorder %s21, 1
      %p38 = por %p36, %p37
      %p39 = scmp.ne.s32.totalorder %s31, %s34
      %p40 = scmp.eq.s32.totalorder %s21, 0
      %p41 = por %p39, %p40
      %p42 = scmp.ne.s32.totalorder %s31, %s34
      %p43 = scmp.eq.s32.totalorder %s26, 1
      %p44 = por %p42, %p43
      %p45 = scmp.ne.s32.totalorder %s34, %s35
      %p46 = scmp.eq.s32.totalorder %s26, 0
      %p47 = por %p45, %p46
      %p48 = scmp.ne.s32.totalorder %s34, %s35
      %p49 = scmp.eq.s32.totalorder %s27, 1
      %p50 = por %p48, %p49
      %p52 = scmp.ne.s32.totalorder %s35, %s51
      %p53 = scmp.eq.s32.totalorder %s27, 0
      %p54 = por %p52, %p53
      %s56 = sadd.s32 %s55, 1
      %p59 = scmp.eq.s32.totalorder %s21, 1
      %p60 = scmp.ne.s32.totalorder %s55, %s57
      %p61 = scmp.eq.s32.totalorder %s21, 0
      %p62 = por %p60, %p61
      %p63 = scmp.ne.s32.totalorder %s55, %s57
      %p64 = scmp.eq.s32.totalorder %s26, 1
      %p65 = por %p63, %p64
      %p66 = scmp.ne.s32.totalorder %s57, %s58
      %p67 = scmp.eq.s32.totalorder %s26, 0
      %p68 = por %p66, %p67
      %p69 = scmp.ne.s32.totalorder %s57, %s58
      %p70 = scmp.eq.s32.totalorder %s27, 1
      %p71 = por %p69, %p70
      %p73 = scmp.ne.s32.totalorder %s58, %s72
      %p74 = scmp.eq.s32.totalorder %s27, 0
      %p75 = por %p73, %p74
      %s77 = sadd.s32 %s76, 1
      %p80 = scmp.eq.s32.totalorder %s21, 1
      %p81 = scmp.ne.s32.totalorder %s76, %s78
      %p82 = scmp.eq.s32.totalorder %s21, 0
      %p83 = por %p81, %p82
      %p84 = scmp.ne.s32.totalorder %s76, %s78
      %p85 = scmp.eq.s32.totalorder %s26, 1
      %p86 = por %p84, %p85
      %p87 = scmp.ne.s32.totalorder %s78, %s79
      %p88 = scmp.eq.s32.totalorder %s26, 0
      %p89 = por %p87, %p88
      %p90 = scmp.ne.s32.totalorder %s78, %s79
      %p91 = scmp.eq.s32.totalorder %s27, 1
      %p92 = por %p90, %p91
      %p94 = scmp.ne.s32.totalorder %s79, %s93
      %p95 = scmp.eq.s32.totalorder %s27, 0
      %p96 = por %p94, %p95
      %s97 = ssub.s32 %s21, %s28
      %p98 = scmp.eq.s32.totalorder %s97, 0
      %s100 = sadd.s32 %s99, 1
      %s101 = scalar_select %p98, %s99, %s100
      %p104 = pneg %p98
      %p105 = scmp.eq.s32.totalorder %s21, 1
      %p106 = por %p104, %p105
      %p107 = scmp.ne.s32.totalorder %s99, %s102
      %p108 = scmp.eq.s32.totalorder %s21, 0
      %p109 = por %p107, %p108
      %p110 = scmp.ne.s32.totalorder %s99, %s102
      %p111 = scmp.eq.s32.totalorder %s26, 1
      %p112 = por %p110, %p111
      %p113 = scmp.ne.s32.totalorder %s102, %s103
      %p114 = scmp.eq.s32.totalorder %s26, 0
      %p115 = por %p113, %p114
      %p116 = scmp.ne.s32.totalorder %s102, %s103
      %p117 = scmp.eq.s32.totalorder %s27, 1
      %p118 = por %p116, %p117
      %p120 = scmp.ne.s32.totalorder %s103, %s119
      %p121 = scmp.eq.s32.totalorder %s27, 0
      %p122 = por %p120, %p121
      %s123 = ssub.s32 %s21, %s28
      %p124 = scmp.eq.s32.totalorder %s123, 0
      %s126 = sadd.s32 %s125, 1
      %s127 = scalar_select %p124, %s125, %s126
      %p130 = pneg %p124
      %p131 = scmp.eq.s32.totalorder %s21, 1
      %p132 = por %p130, %p131
      %p133 = scmp.ne.s32.totalorder %s125, %s128
      %p134 = scmp.eq.s32.totalorder %s21, 0
      %p135 = por %p133, %p134
      %p136 = scmp.ne.s32.totalorder %s125, %s128
      %p137 = scmp.eq.s32.totalorder %s26, 1
      %p138 = por %p136, %p137
      %p139 = scmp.ne.s32.totalorder %s128, %s129
      %p140 = scmp.eq.s32.totalorder %s26, 0
      %p141 = por %p139, %p140
      %p142 = scmp.ne.s32.totalorder %s128, %s129
      %p143 = scmp.eq.s32.totalorder %s27, 1
      %p144 = por %p142, %p143
      %p146 = scmp.ne.s32.totalorder %s129, %s145
      %p147 = scmp.eq.s32.totalorder %s27, 0
      %p148 = por %p146, %p147
      %p149 = scmp.le.s32.totalorder 1, %s21
      %p150 = scmp.lt.s32.totalorder %s21, 3
      %p151 = pnand %p149, %p150
      %p152 = pneg %p151
      // Predicated region
      $region9: #{tpu_custom_call.1} parent=5 // pred_check
        _
      $region10: #{tpu_custom_call.1} parent=5 // pred_check_branch
        %154 = sbr.rel (%p151) target = $region12
      $region11: #{tpu_custom_call.1} parent=5 // pred_region
        %s155 = ssub.s32 %s21, 1
        // Predicated region
        $region13: #{tpu_custom_call.1} parent=11 // pred_check
          %p156 = pneg %p68
        $region14: #{tpu_custom_call.1} parent=11 // pred_check_branch
          %158 = sbr.rel (%p156) target = $region16
        $region15: #{tpu_custom_call.1} parent=11 // pred_region
          %160 = vsyncadd [#allocation6], 0
          %s161 = sshll.u32 %s1, 4
          %s162 = int_to_ptr.hbm [resolvable:$true] %s161
          %s163 = sshll.u32 [#allocation5], 4
          %s164 = int_to_ptr.vmem [resolvable:$true] %s163
          %169 = dma.hbm_to_vmem [thread:$0]  %s162, 4096, %s164, [#allocation6], 256, 256, 16
        $region16: #{tpu_custom_call.1} parent=11 // pred_fallthru
          _
        // Predicated region
        $region17: #{tpu_custom_call.1} parent=11 // pred_check
          %p170 = pneg %p89
        $region18: #{tpu_custom_call.1} parent=11 // pred_check_branch
          %172 = sbr.rel (%p170) target = $region20
        $region19: #{tpu_custom_call.1} parent=11 // pred_region
          _
        $region20: #{tpu_custom_call.1} parent=11 // pred_fallthru
          _
      $region12: #{tpu_custom_call.1} parent=5 // pred_fallthru
        _
      %p173 = scmp.lt.s32.totalorder %s21, 2
      // Predicated region
      $region21: #{tpu_custom_call.1} parent=5 // pred_check
        %p174 = pneg %p173
      $region22: #{tpu_custom_call.1} parent=5 // pred_check_branch
        %176 = sbr.rel (%p174) target = $region24
      $region23: #{tpu_custom_call.1} parent=5 // pred_region
        // Predicated region
        $region25: #{tpu_custom_call.1} parent=23 // pred_check
          %p177 = pneg %p41
        $region26: #{tpu_custom_call.1} parent=23 // pred_check_branch
          %179 = sbr.rel (%p177) target = $region28
        $region27: #{tpu_custom_call.1} parent=23 // pred_region
          %s180 = sand.u32 %s31, 1
          %s181 = scalar_lea.sflag [#allocation3], %s180
          %s182 = sand.u32 %s31, 1
          %s183 = smul.addr %s182, 128
          %s184 = scalar_lea.vmem [#allocation2], %s183
          %s185 = smul.u32 16, %s21
          %187 = vsyncadd %s181, 0
          %s188 = smul.addr %s185, 8
          %s189 = scalar_lea.hbm %s0, %s188
          %s190 = sshll.u32 %s189, 4
          %s191 = int_to_ptr.hbm [resolvable:$true] %s190
          %s192 = sshll.u32 %s184, 4
          %s193 = int_to_ptr.vmem [resolvable:$true] %s192
          %198 = dma.hbm_to_vmem [thread:$0]  %s191, 2048, %s193, %s181, 128, 128, 8
        $region28: #{tpu_custom_call.1} parent=23 // pred_fallthru
          _
      $region24: #{tpu_custom_call.1} parent=5 // pred_fallthru
        _
      %p199 = scmp.le.s32.totalorder 1, %s21
      %p200 = scmp.lt.s32.totalorder %s21, 3
      %p201 = pnand %p199, %p200
      %p202 = pneg %p201
      // Predicated region
      $region29: #{tpu_custom_call.1} parent=5 // pred_check
        _
      $region30: #{tpu_custom_call.1} parent=5 // pred_check_branch
        %204 = sbr.rel (%p201) target = $region32
      $region31: #{tpu_custom_call.1} parent=5 // pred_region
        %s205 = ssub.s32 %s21, 1
        %s206 = sand.u32 %s34, 1
        %s207 = scalar_lea.sflag [#allocation3], %s206
        %s208 = sand.u32 %s34, 1
        %s209 = smul.addr %s208, 128
        %s210 = scalar_lea.vmem [#allocation2], %s209
        // Predicated region
        $region33: #{tpu_custom_call.1} parent=31 // pred_check
          %p211 = pneg %p47
        $region34: #{tpu_custom_call.1} parent=31 // pred_check_branch
          %213 = sbr.rel (%p211) target = $region36
        $region35: #{tpu_custom_call.1} parent=31 // pred_region
          %215 = dma.done %s207, 2048
        $region36: #{tpu_custom_call.1} parent=31 // pred_fallthru
          _
        // Predicated region
        $region37: #{tpu_custom_call.1} parent=31 // pred_check
          %p216 = pneg %p68
        $region38: #{tpu_custom_call.1} parent=31 // pred_check_branch
          %218 = sbr.rel (%p216) target = $region40
        $region39: #{tpu_custom_call.1} parent=31 // pred_region
          %220 = dma.done [#allocation6], 4096
        $region40: #{tpu_custom_call.1} parent=31 // pred_fallthru
          _
        %s221 = sand.u32 %s34, 1
        %s222 = scalar_lea.sflag [#allocation3], %s221
        %s223 = sand.u32 %s34, 1
        %s224 = smul.addr %s223, 128
        %s225 = scalar_lea.vmem [#allocation2], %s224
        %p226 = pneg %p47
        %p227 = pneg %p44
        %p228 = pneg %p68
        %p229 = pneg %p65
        %p230 = pneg %p89
        %p231 = pneg %p86
        %p232 = pneg %p115
        %p233 = pneg %p112
        %s234 = sand.u32 %s102, 1
        %s235 = scalar_lea.sflag [#allocation4], %s234
        %s236 = sand.u32 %s102, 1
        %s237 = smul.addr %s236, 128
        %s238 = scalar_lea.vmem [#allocation7], %s237
        %p239 = pneg %p141
        %p240 = pneg %p138
        %s241 = sand.u32 %s128, 1
        %s242 = scalar_lea.sflag [#allocation9], %s241
        %s243 = sand.u32 %s128, 1
        %s244 = smul.addr %s243, 128
        %s245 = scalar_lea.vmem [#allocation8], %s244
        %s246 = smul.u32 16, %s26
        %s247 = smul.u32 16, %s26
        %s248 = smul.u32 16, %s26
        %v249 = vld [vmem:[%s210] sm:$0xff]
        %v250 = vld [vmem:[%s210 + $0x8] sm:$0xff]
        %v251 = vld [vmem:[%s210 + $0x10] sm:$0xff]
        %v252 = vld [vmem:[%s210 + $0x18] sm:$0xff]
        %v253 = vld [vmem:[%s210 + $0x20] sm:$0xff]
        %v254 = vld [vmem:[%s210 + $0x28] sm:$0xff]
        %v255 = vld [vmem:[%s210 + $0x30] sm:$0xff]
        %v256 = vld [vmem:[%s210 + $0x38] sm:$0xff]
        %v257 = vld [vmem:[%s210 + $0x40] sm:$0xff]
        %v258 = vld [vmem:[%s210 + $0x48] sm:$0xff]
        %v259 = vld [vmem:[%s210 + $0x50] sm:$0xff]
        %v260 = vld [vmem:[%s210 + $0x58] sm:$0xff]
        %v261 = vld [vmem:[%s210 + $0x60] sm:$0xff]
        %v262 = vld [vmem:[%s210 + $0x68] sm:$0xff]
        %v263 = vld [vmem:[%s210 + $0x70] sm:$0xff]
        %v264 = vld [vmem:[%s210 + $0x78] sm:$0xff]
        %v265 = vld [vmem:[#allocation5] sm:$0xff]
        %v266 = vld [vmem:[#allocation5 + $0x8] sm:$0xff]
        %v267 = vld [vmem:[#allocation5 + $0x10] sm:$0xff]
        %v268 = vld [vmem:[#allocation5 + $0x18] sm:$0xff]
        %v269 = vld [vmem:[#allocation5 + $0x20] sm:$0xff]
        %v270 = vld [vmem:[#allocation5 + $0x28] sm:$0xff]
        %v271 = vld [vmem:[#allocation5 + $0x30] sm:$0xff]
        %v272 = vld [vmem:[#allocation5 + $0x38] sm:$0xff]
        %v273 = vld [vmem:[#allocation5 + $0x40] sm:$0xff]
        %v274 = vld [vmem:[#allocation5 + $0x48] sm:$0xff]
        %v275 = vld [vmem:[#allocation5 + $0x50] sm:$0xff]
        %v276 = vld [vmem:[#allocation5 + $0x58] sm:$0xff]
        %v277 = vld [vmem:[#allocation5 + $0x60] sm:$0xff]
        %v278 = vld [vmem:[#allocation5 + $0x68] sm:$0xff]
        %v279 = vld [vmem:[#allocation5 + $0x70] sm:$0xff]
        %v280 = vld [vmem:[#allocation5 + $0x78] sm:$0xff]
        %v281 = vld [vmem:[#allocation5 + $0x80] sm:$0xff]
        %v282 = vld [vmem:[#allocation5 + $0x88] sm:$0xff]
        %v283 = vld [vmem:[#allocation5 + $0x90] sm:$0xff]
        %v284 = vld [vmem:[#allocation5 + $0x98] sm:$0xff]
        %v285 = vld [vmem:[#allocation5 + $0xa0] sm:$0xff]
        %v286 = vld [vmem:[#allocation5 + $0xa8] sm:$0xff]
        %v287 = vld [vmem:[#allocation5 + $0xb0] sm:$0xff]
        %v288 = vld [vmem:[#allocation5 + $0xb8] sm:$0xff]
        %v289 = vld [vmem:[#allocation5 + $0xc0] sm:$0xff]
        %v290 = vld [vmem:[#allocation5 + $0xc8] sm:$0xff]
        %v291 = vld [vmem:[#allocation5 + $0xd0] sm:$0xff]
        %v292 = vld [vmem:[#allocation5 + $0xd8] sm:$0xff]
        %v293 = vld [vmem:[#allocation5 + $0xe0] sm:$0xff]
        %v294 = vld [vmem:[#allocation5 + $0xe8] sm:$0xff]
        %v295 = vld [vmem:[#allocation5 + $0xf0] sm:$0xff]
        %v296 = vld [vmem:[#allocation5 + $0xf8] sm:$0xff]
        %297 = vmatpush.msra.mxu0 %v295
        %298 = vmatpush.msra.mxu0 %v293
        %299 = vmatpush.msra.mxu0 %v291
        %300 = vmatpush.msra.mxu0 %v289
        %301 = vmatpush.msra.mxu0 %v287
        %302 = vmatpush.msra.mxu0 %v285
        %303 = vmatpush.msra.mxu0 %v283
        %304 = vmatpush.msra.mxu0 %v281
        %305 = vmatpush.msra.mxu0 %v279
        %306 = vmatpush.msra.mxu0 %v277
        %307 = vmatpush.msra.mxu0 %v275
        %308 = vmatpush.msra.mxu0 %v273
        %309 = vmatpush.msra.mxu0 %v271
        %310 = vmatpush.msra.mxu0 %v269
        %311 = vmatpush.msra.mxu0 %v267
        %312 = vmatpush.msra.mxu0 %v265
        %313 = vmatmul.f32.gmra.mxu0 %v249
        %v314 = vpop.f32.mrf.mxu0
        %v315 = vadd.f32 0.0, %v314
        %316 = vmatmul.f32.gmra.mxu0 %v250
        %v317 = vpop.f32.mrf.mxu0
        %v318 = vadd.f32 0.0, %v317
        %319 = vmatmul.f32.gmra.mxu0 %v251
        %v320 = vpop.f32.mrf.mxu0
        %v321 = vadd.f32 0.0, %v320
        %322 = vmatmul.f32.gmra.mxu0 %v252
        %v323 = vpop.f32.mrf.mxu0
        %v324 = vadd.f32 0.0, %v323
        %325 = vmatmul.f32.gmra.mxu0 %v253
        %v326 = vpop.f32.mrf.mxu0
        %v327 = vadd.f32 0.0, %v326
        %328 = vmatmul.f32.gmra.mxu0 %v254
        %v329 = vpop.f32.mrf.mxu0
        %v330 = vadd.f32 0.0, %v329
        %331 = vmatmul.f32.gmra.mxu0 %v255
        %v332 = vpop.f32.mrf.mxu0
        %v333 = vadd.f32 0.0, %v332
        %334 = vmatmul.f32.gmra.mxu0 %v256
        %v335 = vpop.f32.mrf.mxu0
        %v336 = vadd.f32 0.0, %v335
        %337 = vmatmul.f32.gmra.mxu0 %v257
        %v338 = vpop.f32.mrf.mxu0
        %v339 = vadd.f32 0.0, %v338
        %340 = vmatmul.f32.gmra.mxu0 %v258
        %v341 = vpop.f32.mrf.mxu0
        %v342 = vadd.f32 0.0, %v341
        %343 = vmatmul.f32.gmra.mxu0 %v259
        %v344 = vpop.f32.mrf.mxu0
        %v345 = vadd.f32 0.0, %v344
        %346 = vmatmul.f32.gmra.mxu0 %v260
        %v347 = vpop.f32.mrf.mxu0
        %v348 = vadd.f32 0.0, %v347
        %349 = vmatmul.f32.gmra.mxu0 %v261
        %v350 = vpop.f32.mrf.mxu0
        %v351 = vadd.f32 0.0, %v350
        %352 = vmatmul.f32.gmra.mxu0 %v262
        %v353 = vpop.f32.mrf.mxu0
        %v354 = vadd.f32 0.0, %v353
        %355 = vmatmul.f32.gmra.mxu0 %v263
        %v356 = vpop.f32.mrf.mxu0
        %v357 = vadd.f32 0.0, %v356
        %358 = vmatmul.f32.gmra.mxu0 %v264
        %v359 = vpop.f32.mrf.mxu0
        %v360 = vadd.f32 0.0, %v359
        %361 = vdwg.mxu0
        %362 = vmatpush.msra.mxu0 %v296
        %363 = vmatpush.msra.mxu0 %v294
        %364 = vmatpush.msra.mxu0 %v292
        %365 = vmatpush.msra.mxu0 %v290
        %366 = vmatpush.msra.mxu0 %v288
        %367 = vmatpush.msra.mxu0 %v286
        %368 = vmatpush.msra.mxu0 %v284
        %369 = vmatpush.msra.mxu0 %v282
        %370 = vmatpush.msra.mxu0 %v280
        %371 = vmatpush.msra.mxu0 %v278
        %372 = vmatpush.msra.mxu0 %v276
        %373 = vmatpush.msra.mxu0 %v274
        %374 = vmatpush.msra.mxu0 %v272
        %375 = vmatpush.msra.mxu0 %v270
        %376 = vmatpush.msra.mxu0 %v268
        %377 = vmatpush.msra.mxu0 %v266
        %378 = vmatmul.f32.gmra.mxu0 %v249
        %v379 = vpop.f32.mrf.mxu0
        %v380 = vadd.f32 0.0, %v379
        %381 = vmatmul.f32.gmra.mxu0 %v250
        %v382 = vpop.f32.mrf.mxu0
        %v383 = vadd.f32 0.0, %v382
        %384 = vmatmul.f32.gmra.mxu0 %v251
        %v385 = vpop.f32.mrf.mxu0
        %v386 = vadd.f32 0.0, %v385
        %387 = vmatmul.f32.gmra.mxu0 %v252
        %v388 = vpop.f32.mrf.mxu0
        %v389 = vadd.f32 0.0, %v388
        %390 = vmatmul.f32.gmra.mxu0 %v253
        %v391 = vpop.f32.mrf.mxu0
        %v392 = vadd.f32 0.0, %v391
        %393 = vmatmul.f32.gmra.mxu0 %v254
        %v394 = vpop.f32.mrf.mxu0
        %v395 = vadd.f32 0.0, %v394
        %396 = vmatmul.f32.gmra.mxu0 %v255
        %v397 = vpop.f32.mrf.mxu0
        %v398 = vadd.f32 0.0, %v397
        %399 = vmatmul.f32.gmra.mxu0 %v256
        %v400 = vpop.f32.mrf.mxu0
        %v401 = vadd.f32 0.0, %v400
        %402 = vmatmul.f32.gmra.mxu0 %v257
        %v403 = vpop.f32.mrf.mxu0
        %v404 = vadd.f32 0.0, %v403
        %405 = vmatmul.f32.gmra.mxu0 %v258
        %v406 = vpop.f32.mrf.mxu0
        %v407 = vadd.f32 0.0, %v406
        %408 = vmatmul.f32.gmra.mxu0 %v259
        %v409 = vpop.f32.mrf.mxu0
        %v410 = vadd.f32 0.0, %v409
        %411 = vmatmul.f32.gmra.mxu0 %v260
        %v412 = vpop.f32.mrf.mxu0
        %v413 = vadd.f32 0.0, %v412
        %414 = vmatmul.f32.gmra.mxu0 %v261
        %v415 = vpop.f32.mrf.mxu0
        %v416 = vadd.f32 0.0, %v415
        %417 = vmatmul.f32.gmra.mxu0 %v262
        %v418 = vpop.f32.mrf.mxu0
        %v419 = vadd.f32 0.0, %v418
        %420 = vmatmul.f32.gmra.mxu0 %v263
        %v421 = vpop.f32.mrf.mxu0
        %v422 = vadd.f32 0.0, %v421
        %423 = vmatmul.f32.gmra.mxu0 %v264
        %v424 = vpop.f32.mrf.mxu0
        %v425 = vadd.f32 0.0, %v424
        %426 = vdwg.mxu0
        %427 = vst [vmem:[%s238] sm:$0xff] %v315
        %428 = vst [vmem:[%s238 + $0x8] sm:$0xff] %v318
        %429 = vst [vmem:[%s238 + $0x10] sm:$0xff] %v321
        %430 = vst [vmem:[%s238 + $0x18] sm:$0xff] %v324
        %431 = vst [vmem:[%s238 + $0x20] sm:$0xff] %v327
        %432 = vst [vmem:[%s238 + $0x28] sm:$0xff] %v330
        %433 = vst [vmem:[%s238 + $0x30] sm:$0xff] %v333
        %434 = vst [vmem:[%s238 + $0x38] sm:$0xff] %v336
        %435 = vst [vmem:[%s238 + $0x40] sm:$0xff] %v339
        %436 = vst [vmem:[%s238 + $0x48] sm:$0xff] %v342
        %437 = vst [vmem:[%s238 + $0x50] sm:$0xff] %v345
        %438 = vst [vmem:[%s238 + $0x58] sm:$0xff] %v348
        %439 = vst [vmem:[%s238 + $0x60] sm:$0xff] %v351
        %440 = vst [vmem:[%s238 + $0x68] sm:$0xff] %v354
        %441 = vst [vmem:[%s238 + $0x70] sm:$0xff] %v357
        %442 = vst [vmem:[%s238 + $0x78] sm:$0xff] %v360
        %v443 = vld [vmem:[%s2] sm:$0x1]
        %v445 = vperm.slane %v443, 0
        %v447 = vadd.f32 %v380, %v445
        %v448 = vadd.f32 %v383, %v445
        %v449 = vadd.f32 %v386, %v445
        %v450 = vadd.f32 %v389, %v445
        %v451 = vadd.f32 %v392, %v445
        %v452 = vadd.f32 %v395, %v445
        %v453 = vadd.f32 %v398, %v445
        %v454 = vadd.f32 %v401, %v445
        %v455 = vadd.f32 %v404, %v445
        %v456 = vadd.f32 %v407, %v445
        %v457 = vadd.f32 %v410, %v445
        %v458 = vadd.f32 %v413, %v445
        %v459 = vadd.f32 %v416, %v445
        %v460 = vadd.f32 %v419, %v445
        %v461 = vadd.f32 %v422, %v445
        %v462 = vadd.f32 %v425, %v445
        %s463 = smul.u32 %s26, 128
        %v464 = vlaneseq
        %v465 = vshrl.u32 %v464, 7
        %v466 = vadd.s32 %v465, 8
        %v467 = vadd.s32 %v465, 16
        %v468 = vadd.s32 %v465, 24
        %v469 = vadd.s32 %v465, 32
        %v470 = vadd.s32 %v465, 40
        %v471 = vadd.s32 %v465, 48
        %v472 = vadd.s32 %v465, 56
        %v473 = vadd.s32 %v465, 64
        %v474 = vadd.s32 %v465, 72
        %v475 = vadd.s32 %v465, 80
        %v476 = vadd.s32 %v465, 88
        %v477 = vadd.s32 %v465, 96
        %v478 = vadd.s32 %v465, 104
        %v479 = vadd.s32 %v465, 112
        %v480 = vadd.s32 %v465, 120
        %v481 = vstv %s463
        %v482 = vadd.s32 %v481, %v465
        %v483 = vadd.s32 %v481, %v466
        %v484 = vadd.s32 %v481, %v467
        %v485 = vadd.s32 %v481, %v468
        %v486 = vadd.s32 %v481, %v469
        %v487 = vadd.s32 %v481, %v470
        %v488 = vadd.s32 %v481, %v471
        %v489 = vadd.s32 %v481, %v472
        %v490 = vadd.s32 %v481, %v473
        %v491 = vadd.s32 %v481, %v474
        %v492 = vadd.s32 %v481, %v475
        %v493 = vadd.s32 %v481, %v476
        %v494 = vadd.s32 %v481, %v477
        %v495 = vadd.s32 %v481, %v478
        %v496 = vadd.s32 %v481, %v479
        %v497 = vadd.s32 %v481, %v480
        %vm498 = vcmp.lt.s32.totalorder %v482, 200
        %vm499 = vcmp.lt.s32.totalorder %v483, 200
        %vm500 = vcmp.lt.s32.totalorder %v484, 200
        %vm501 = vcmp.lt.s32.totalorder %v485, 200
        %vm502 = vcmp.lt.s32.totalorder %v486, 200
        %vm503 = vcmp.lt.s32.totalorder %v487, 200
        %vm504 = vcmp.lt.s32.totalorder %v488, 200
        %vm505 = vcmp.lt.s32.totalorder %v489, 200
        %vm506 = vcmp.lt.s32.totalorder %v490, 200
        %vm507 = vcmp.lt.s32.totalorder %v491, 200
        %vm508 = vcmp.lt.s32.totalorder %v492, 200
        %vm509 = vcmp.lt.s32.totalorder %v493, 200
        %vm510 = vcmp.lt.s32.totalorder %v494, 200
        %vm511 = vcmp.lt.s32.totalorder %v495, 200
        %vm512 = vcmp.lt.s32.totalorder %v496, 200
        %vm513 = vcmp.lt.s32.totalorder %v497, 200
        %v514 = vsel %vm498, 1, 0
        %v515 = vsel %vm499, 1, 0
        %v516 = vsel %vm500, 1, 0
        %v517 = vsel %vm501, 1, 0
        %v518 = vsel %vm502, 1, 0
        %v519 = vsel %vm503, 1, 0
        %v520 = vsel %vm504, 1, 0
        %v521 = vsel %vm505, 1, 0
        %v522 = vsel %vm506, 1, 0
        %v523 = vsel %vm507, 1, 0
        %v524 = vsel %vm508, 1, 0
        %v525 = vsel %vm509, 1, 0
        %v526 = vsel %vm510, 1, 0
        %v527 = vsel %vm511, 1, 0
        %v528 = vsel %vm512, 1, 0
        %v529 = vsel %vm513, 1, 0
        %vm530 = vcmp.eq.s32.totalorder %v514, 1
        %vm531 = vcmp.eq.s32.totalorder %v515, 1
        %vm532 = vcmp.eq.s32.totalorder %v516, 1
        %vm533 = vcmp.eq.s32.totalorder %v517, 1
        %vm534 = vcmp.eq.s32.totalorder %v518, 1
        %vm535 = vcmp.eq.s32.totalorder %v519, 1
        %vm536 = vcmp.eq.s32.totalorder %v520, 1
        %vm537 = vcmp.eq.s32.totalorder %v521, 1
        %vm538 = vcmp.eq.s32.totalorder %v522, 1
        %vm539 = vcmp.eq.s32.totalorder %v523, 1
        %vm540 = vcmp.eq.s32.totalorder %v524, 1
        %vm541 = vcmp.eq.s32.totalorder %v525, 1
        %vm542 = vcmp.eq.s32.totalorder %v526, 1
        %vm543 = vcmp.eq.s32.totalorder %v527, 1
        %vm544 = vcmp.eq.s32.totalorder %v528, 1
        %vm545 = vcmp.eq.s32.totalorder %v529, 1
        %v546 = vsel %vm530, %v447, 0.0
        %v547 = vsel %vm531, %v448, 0.0
        %v548 = vsel %vm532, %v449, 0.0
        %v549 = vsel %vm533, %v450, 0.0
        %v550 = vsel %vm534, %v451, 0.0
        %v551 = vsel %vm535, %v452, 0.0
        %v552 = vsel %vm536, %v453, 0.0
        %v553 = vsel %vm537, %v454, 0.0
        %v554 = vsel %vm538, %v455, 0.0
        %v555 = vsel %vm539, %v456, 0.0
        %v556 = vsel %vm540, %v457, 0.0
        %v557 = vsel %vm541, %v458, 0.0
        %v558 = vsel %vm542, %v459, 0.0
        %v559 = vsel %vm543, %v460, 0.0
        %v560 = vsel %vm544, %v461, 0.0
        %v561 = vsel %vm545, %v462, 0.0
        %562 = vst [vmem:[%s245] sm:$0xff] %v546
        %563 = vst [vmem:[%s245 + $0x8] sm:$0xff] %v547
        %564 = vst [vmem:[%s245 + $0x10] sm:$0xff] %v548
        %565 = vst [vmem:[%s245 + $0x18] sm:$0xff] %v549
        %566 = vst [vmem:[%s245 + $0x20] sm:$0xff] %v550
        %567 = vst [vmem:[%s245 + $0x28] sm:$0xff] %v551
        %568 = vst [vmem:[%s245 + $0x30] sm:$0xff] %v552
        %569 = vst [vmem:[%s245 + $0x38] sm:$0xff] %v553
        %570 = vst [vmem:[%s245 + $0x40] sm:$0xff] %v554
        %571 = vst [vmem:[%s245 + $0x48] sm:$0xff] %v555
        %572 = vst [vmem:[%s245 + $0x50] sm:$0xff] %v556
        %573 = vst [vmem:[%s245 + $0x58] sm:$0xff] %v557
        %574 = vst [vmem:[%s245 + $0x60] sm:$0xff] %v558
        %575 = vst [vmem:[%s245 + $0x68] sm:$0xff] %v559
        %576 = vst [vmem:[%s245 + $0x70] sm:$0xff] %v560
        %577 = vst [vmem:[%s245 + $0x78] sm:$0xff] %v561
        %s578 = sand.u32 %s102, 1
        %s579 = scalar_lea.sflag [#allocation4], %s578
        %s580 = sand.u32 %s102, 1
        %s581 = smul.addr %s580, 128
        %s582 = scalar_lea.vmem [#allocation7], %s581
        %s583 = sand.u32 %s128, 1
        %s584 = scalar_lea.sflag [#allocation9], %s583
        %s585 = sand.u32 %s128, 1
        %s586 = smul.addr %s585, 128
        %s587 = scalar_lea.vmem [#allocation8], %s586
        // Predicated region
        $region41: #{tpu_custom_call.1} parent=31 // pred_check
          %p588 = pneg %p112
        $region42: #{tpu_custom_call.1} parent=31 // pred_check_branch
          %590 = sbr.rel (%p588) target = $region44
        $region43: #{tpu_custom_call.1} parent=31 // pred_region
          %s591 = smul.u32 16, %s26
          %593 = vsyncadd %s579, 0
          %s594 = smul.addr %s591, 8
          %s595 = scalar_lea.hbm %s3, %s594
          %s596 = sshll.u32 %s582, 4
          %s597 = int_to_ptr.vmem [resolvable:$true] %s596
          %s598 = sshll.u32 %s595, 4
          %s599 = int_to_ptr.hbm [resolvable:$true] %s598
          %604 = dma.vmem_to_hbm [thread:$0]  %s597, 2048, %s599, %s579, 128, 128, 8
        $region44: #{tpu_custom_call.1} parent=31 // pred_fallthru
          _
        // Predicated region
        $region45: #{tpu_custom_call.1} parent=31 // pred_check
          %p605 = pneg %p138
        $region46: #{tpu_custom_call.1} parent=31 // pred_check_branch
          %607 = sbr.rel (%p605) target = $region48
        $region47: #{tpu_custom_call.1} parent=31 // pred_region
          %s608 = smul.u32 16, %s26
          %610 = vsyncadd %s584, 0
          %s611 = smul.addr %s608, 8
          %s612 = scalar_lea.hbm %s4, %s611
          %s613 = sshll.u32 %s587, 4
          %s614 = int_to_ptr.vmem [resolvable:$true] %s613
          %s615 = sshll.u32 %s612, 4
          %s616 = int_to_ptr.hbm [resolvable:$true] %s615
          %621 = dma.vmem_to_hbm [thread:$0]  %s614, 2048, %s616, %s584, 128, 128, 8
        $region48: #{tpu_custom_call.1} parent=31 // pred_fallthru
          _
      $region32: #{tpu_custom_call.1} parent=5 // pred_fallthru
        _
      %p622 = scmp.le.s32.totalorder 2, %s21
      // Predicated region
      $region49: #{tpu_custom_call.1} parent=5 // pred_check
        %p623 = pneg %p622
      $region50: #{tpu_custom_call.1} parent=5 // pred_check_branch
        %625 = sbr.rel (%p623) target = $region52
      $region51: #{tpu_custom_call.1} parent=5 // pred_region
        %s626 = ssub.s32 %s21, 2
        // Predicated region
        $region53: #{tpu_custom_call.1} parent=51 // pred_check
          %p627 = pneg %p118
        $region54: #{tpu_custom_call.1} parent=51 // pred_check_branch
          %629 = sbr.rel (%p627) target = $region56
        $region55: #{tpu_custom_call.1} parent=51 // pred_region
          %s630 = sand.u32 %s103, 1
          %s631 = scalar_lea.sflag [#allocation4], %s630
          %s632 = sand.u32 %s103, 1
          %s633 = smul.addr %s632, 128
          %s634 = scalar_lea.vmem [#allocation7], %s633
          %636 = dma.done %s631, 2048
        $region56: #{tpu_custom_call.1} parent=51 // pred_fallthru
          _
        // Predicated region
        $region57: #{tpu_custom_call.1} parent=51 // pred_check
          %p637 = pneg %p144
        $region58: #{tpu_custom_call.1} parent=51 // pred_check_branch
          %639 = sbr.rel (%p637) target = $region60
        $region59: #{tpu_custom_call.1} parent=51 // pred_region
          %s640 = sand.u32 %s129, 1
          %s641 = scalar_lea.sflag [#allocation9], %s640
          %s642 = sand.u32 %s129, 1
          %s643 = smul.addr %s642, 128
          %s644 = scalar_lea.vmem [#allocation8], %s643
          %646 = dma.done %s641, 2048
        $region60: #{tpu_custom_call.1} parent=51 // pred_fallthru
          _
      $region52: #{tpu_custom_call.1} parent=5 // pred_fallthru
        _
    $region6: #{tpu_custom_call.1} parent=1 // loop_footer
      %s25 = sadd.s32 1, %s21
    $region7: #{tpu_custom_call.1} parent=1 // loop_footer_branch
      %20 = sbr.rel target = $region3
    $region8: #{tpu_custom_call.1} parent=1 // loop_exit
      _
    %647 = vsyncpa [#allocation3], 1
    %s648 = scalar_lea.sflag [#allocation3], 1
    %649 = vsyncpa %s648, 1
    %650 = vsyncpa [#allocation6], 1
    %651 = vsyncpa [#allocation4], 1
    %s652 = scalar_lea.sflag [#allocation4], 1
    %653 = vsyncpa %s652, 1
    %654 = vsyncpa [#allocation9], 1
    %s655 = scalar_lea.sflag [#allocation9], 1
    %656 = vsyncpa %s655, 1

</llo_original>
